<compile_context>
chip_gen: v7x
topology: tpu7x:2x2x1
jax: 0.10.0
libtpu: 0.0.40
codegen_flags: <defaults>
</compile_context>

<pallas_src>
import math

import jax
import jax.numpy as jnp
from jax.experimental import pallas as pl
from jax.experimental.pallas import tpu as pltpu

_LOG_2PI = math.log(2.0 * math.pi)

_VMEM_PER_BUFFER_CAP = 8 << 20        # padded input tile bytes per pipeline buffer
_HBM_BYTES_PER_STEP_TARGET = 4 << 20  # real HBM traffic target per grid step
_SMALL_INPUT_BYTES = 1 << 20          # below this, pure-JAX fast path wins


def _normal_logdensity_kernel(z_ref, o_ref):
    # z_ref: (block_b, D) tile in VMEM (input dtype); o_ref: (1, 1, block_b) lane-dense row.
    z = z_ref[...].astype(jnp.float32)
    d = z_ref.shape[1]
    # Hoisted constant:
    #   sum_j [-0.5*z_j^2 - 0.5*log(2*pi)] == -0.5 * sum_j z_j^2 - 0.5*D*log(2*pi)
    s = jnp.sum(z * z, axis=1)                  # (block_b,) cross-lane reduce (XLU)
    o = -0.5 * s - (0.5 * d) * _LOG_2PI         # per-row scale + offset (VPU)
    o_ref[...] = o.reshape(o_ref.shape)         # unmasked, lane-dense store


def _round_up(x, m):
    return ((x + m - 1) // m) * m


def _cdiv(a, b):
    return -(-a // b)


def _sublane_multiple(itemsize):
    # f32 -> 8, bf16/f16 -> 16, int8/fp8 -> 32 (sub-32-bit dtypes pack along sublanes).
    return max(8, 32 // int(itemsize))


def _choose_block_b(B, D, itemsize):
    """Pick the batch tile from a bytes budget, not a row count.

    - capped so the padded (block_b, roundup(D,128)) input tile is <= 8 MiB per
      pipeline buffer (16 MiB double-buffered; vmem_limit_bytes is raised to match,
      which keeps v5e's smaller default scoped VMEM safe and stays far below v7x's
      64 MiB physical per-TC VMEM),
    - targets ~4 MiB of real HBM traffic per grid step so the ~0.35 us per-step
      pipeline overhead is amortized,
    - multiples of 128 when tiled (lane-dense unmasked output stores), dtype-aware
      sublane rounding when a single block covers B,
    - prefers an even block count when there is more than one block so v7x's two
      TensorCores split the "parallel" axis evenly.
    """
    sub = _sublane_multiple(itemsize)
    if B <= 1024:
        return _round_up(B, sub)

    lanes = _round_up(D, 128)
    cap_vmem = _VMEM_PER_BUFFER_CAP // (lanes * itemsize)
    cap_hbm = _HBM_BYTES_PER_STEP_TARGET // (D * itemsize)
    bb = min(cap_vmem, cap_hbm, 32768, B)
    bb = max(sub, (bb // 128) * 128)

    nb = _cdiv(B, bb)
    if nb > 1 and nb % 2 == 1:
        # Best-effort: shrink the tile so the block count becomes even (v7x 2-TC balance).
        bb2 = _round_up(_cdiv(B, nb + 1), 128)
        if bb2 >= 128 and _cdiv(B, bb2) % 2 == 0:
            bb = bb2
    return bb


def _reference(z):
    z = z.astype(jnp.float32)
    return jnp.sum(-0.5 * z * z, axis=1) - 0.5 * z.shape[1] * _LOG_2PI


def normal_log_density(z, block_b=None, use_pallas=None):
    """Pallas TPU implementation of NormalLogDensity.forward.

    z: (B, D) array. Returns (B,) float32 = Normal(0,1).log_prob(z).sum(1).
    """
    B, D = z.shape
    itemsize = jnp.dtype(z.dtype).itemsize

    if use_pallas is None:
        use_pallas = B * D * itemsize >= _SMALL_INPUT_BYTES
    if not use_pallas:
        # Tiny batches: pallas_call launch + pipeline setup dwarfs the compute.
        return _reference(z)

    sub = _sublane_multiple(itemsize)
    if block_b is None:
        block_b = _choose_block_b(B, D, itemsize)
    else:
        block_b = _round_up(block_b, sub)

    num_blocks = _cdiv(B, block_b)

    # Raise scoped VMEM to cover double-buffering of the *padded* input tile plus
    # the output rows; stays well under physical VMEM on v5e/v6e/v7x.
    padded_in_tile = block_b * _round_up(D, 128) * itemsize
    out_tile = block_b * 4
    vmem_limit = 2 * (padded_in_tile + out_tile) + (4 << 20)
    vmem_limit = int(min(max(vmem_limit, 16 << 20), 48 << 20))

    cost = pl.CostEstimate(
        flops=2 * B * D,
        transcendentals=0,
        # True HBM read in the input dtype + the padded output slab actually written.
        bytes_accessed=B * D * itemsize + num_blocks * block_b * 4,
    )

    out = pl.pallas_call(
        _normal_logdensity_kernel,
        out_shape=jax.ShapeDtypeStruct((num_blocks, 1, block_b), jnp.float32),
        grid=(num_blocks,),
        in_specs=[pl.BlockSpec((block_b, D), lambda i: (i, 0))],
        out_specs=pl.BlockSpec((1, 1, block_b), lambda i: (i, 0, 0)),
        compiler_params=pltpu.CompilerParams(
            dimension_semantics=("parallel",),
            vmem_limit_bytes=vmem_limit,
        ),
        cost_estimate=cost,
    )(z)

    flat = out.reshape(num_blocks * block_b)
    if num_blocks * block_b == B:
        return flat
    # Rows of the last (partial) batch block beyond B are garbage; slice them off.
    return flat[:B]


if __name__ == "__main__":
    key = jax.random.PRNGKey(0)
    k1, k2, k3, k4 = jax.random.split(key, 4)

    # 1) Tiny batch consistent with the module's typical use (batch=8, hidden=32):
    #    takes the pure-JAX fast path.
    z1 = jax.random.normal(k1, (8, 32), dtype=jnp.float32)
    o1 = jax.block_until_ready(normal_log_density(z1))
    assert o1.shape == (8,)
    assert jnp.allclose(o1, _reference(z1), rtol=1e-5, atol=1e-5)

    # 2) Force the Pallas path at a small shape: multi-block grid, partial last
    #    block, trailing slice.
    z2 = jax.random.normal(k2, (300, 32), dtype=jnp.float32)
    o2 = jax.block_until_ready(normal_log_density(z2, block_b=128, use_pallas=True))
    assert o2.shape == (300,)
    assert jnp.allclose(o2, _reference(z2), rtol=1e-5, atol=1e-5)

    # 3) Force the Pallas path with aligned B: auto tile picker, no trailing slice.
    z3 = jax.random.normal(k3, (1024, 32), dtype=jnp.float32)
    o3 = jax.block_until_ready(normal_log_density(z3, use_pallas=True))
    assert o3.shape == (1024,)
    assert jnp.allclose(o3, _reference(z3), rtol=1e-5, atol=1e-5)

    # 4) bf16 input stays bf16 through the BlockSpec (cast in-kernel);
    #    block_b rounds to the bf16 sublane multiple (16).
    z4 = jax.random.normal(k4, (512, 32), dtype=jnp.float32).astype(jnp.bfloat16)
    o4 = jax.block_until_ready(normal_log_density(z4, block_b=120, use_pallas=True))
    assert o4.shape == (512,)
    assert jnp.allclose(o4, _reference(z4), rtol=1e-3, atol=1e-3)

    print("KERNEL_OK")
</pallas_src>

<mosaic_0001>
module attributes {stable_mosaic.version = 11 : i64} {
  func.func @_normal_logdensity_kernel(%arg0: i32, %arg1: memref<128x32xf32, #tpu.memory_space<vmem>>, %arg2: memref<1x1x128xf32, #tpu.memory_space<vmem>>) attributes {dimension_semantics = [#tpu.dimension_semantics<parallel>], iteration_bounds = array<i64: 3>, scalar_prefetch = 0 : i64, scratch_operands = 0 : i64, tpu.core_type = #tpu.core_type<tc>, window_params = [{transform_indices = @transform_0, window_bounds = array<i64: 128, 32>}, {transform_indices = @transform_1, window_bounds = array<i64: 1, 1, 128>}]} {
    %c0 = arith.constant 0 : index
    %c0_0 = arith.constant 0 : index
    %0 = vector.load %arg1[%c0, %c0_0] : memref<128x32xf32, #tpu.memory_space<vmem>>, vector<128x32xf32>
    %1 = arith.mulf %0, %0 : vector<128x32xf32>
    %cst = arith.constant dense<0.000000e+00> : vector<128xf32>
    %2 = vector.multi_reduction <add>, %1, %cst [1] : vector<128x32xf32> to vector<128xf32>
    %cst_1 = arith.constant -5.000000e-01 : f32
    %3 = vector.broadcast %cst_1 : f32 to vector<128xf32>
    %4 = arith.mulf %3, %2 : vector<128xf32>
    %cst_2 = arith.constant 29.4060326 : f32
    %5 = vector.broadcast %cst_2 : f32 to vector<128xf32>
    %6 = arith.subf %4, %5 : vector<128xf32>
    %7 = vector.shape_cast %6 : vector<128xf32> to vector<1x1x128xf32>
    %c0_3 = arith.constant 0 : index
    %c0_4 = arith.constant 0 : index
    %c0_5 = arith.constant 0 : index
    %8 = vector.load %arg2[%c0_3, %c0_4, %c0_5] : memref<1x1x128xf32, #tpu.memory_space<vmem>>, vector<1x1x128xf32>
    tpu.vector_store %arg2[%c0_3, %c0_4, %c0_5], %7 {strides = array<i32>} : memref<1x1x128xf32, #tpu.memory_space<vmem>>, vector<1x1x128xf32>,
    return
  }
  func.func @transform_0(%arg0: i32) -> (i32, i32) {
    %c0_i32 = arith.constant 0 : i32
    %c0_i32_0 = arith.constant 0 : i32
    return %arg0, %c0_i32 : i32, i32
  }
  func.func @transform_1(%arg0: i32) -> (i32, i32, i32) {
    %c0_i32 = arith.constant 0 : i32
    %c0_i32_0 = arith.constant 0 : i32
    %c0_i32_1 = arith.constant 0 : i32
    return %arg0, %c0_i32, %c0_i32_0 : i32, i32, i32
  }
}

</mosaic_0001>

<llo_original>
// kernel: tpu_custom_call.1
$region0: #{tpu_custom_call.1}
  #allocation0 [shape = 'u32[]', space=smem, size = 0x4, offset = 0x4, fixed_abs, tag = 'smem constant byte address 0x4 - core index']
  #allocation1 [shape = 'u32[144,128]{1,0:T(1,128)}', space=vmem, size = 0x12000, scoped, tag = 'internal scratch']
  %s0 = inlined_call_operand.vmem [shape: f32[300,32], index: 0, kind: input, shape index: {}]
  %s1 = inlined_call_operand.hbm [shape: f32[3,1,128], index: 1, kind: output, shape index: {}]
  %s2 = sld [smem:[#allocation0]]
  $region37: #{tpu_custom_call.1} parent=0
    _
  %s4 = ssub.s32 1, %s2
  %s5 = scalar_select 0, %s4, %s2
  $region1: #{tpu_custom_call.1} parent=0
    #allocation2 [shape = 'u8[1024]{0}', space=vmem, size = 0x400, scoped, tag = 'output window, operand 0']
    #allocation3 [shape = 's32[2]{0}', space=sflag, size = 0x8, scoped, tag = 'scoped memory for tpu_custom_call.1']
    %6 = vsyncpa [#allocation3], 0
    %s7 = scalar_lea.sflag [#allocation3], 1
    %8 = vsyncpa %s7, 0
    loop: start=0, step=1, limit=5
    $region2: #{tpu_custom_call.1} parent=1 // loop_pre_header
      _
    $region3: #{tpu_custom_call.1} parent=1 // loop_header
      %s10 = sphi 0, %s14
      %p11 = scmp.ge.s32.totalorder %s10, 5
      %s20 = sphi 0, %s22
      %s23 = sphi 0, %s20
      %s24 = sphi 0, %s23
      %s40 = sphi 0, %s24
      %s46 = sphi 0, %s48
      %s49 = sphi 0, %s46
      %s50 = sphi 0, %s49
      %s66 = sphi 0, %s50
    $region4: #{tpu_custom_call.1} parent=1 // loop_header_branch
      %13 = sbr.rel (%p11) target = $region8
    $region5: #{tpu_custom_call.1} parent=1 // loop_body
      %s15 = ssub.s32 %s10, 1
      %s16 = ssub.s32 %s10, 2
      %s17 = sadd.s32 %s10, 1
      %s18 = ssub.s32 %s10, %s17
      %p19 = scmp.eq.s32.totalorder %s18, 0
      %s21 = sadd.s32 %s20, 1
      %s22 = scalar_select %p19, %s20, %s21
      %p25 = pneg %p19
      %p26 = scmp.eq.s32.totalorder %s10, 2
      %p27 = por %p25, %p26
      %p28 = scmp.ne.s32.totalorder %s20, %s23
      %p29 = scmp.eq.s32.totalorder %s10, 0
      %p30 = por %p28, %p29
      %p31 = scmp.ne.s32.totalorder %s20, %s23
      %p32 = scmp.eq.s32.totalorder %s15, 2
      %p33 = por %p31, %p32
      %p34 = scmp.ne.s32.totalorder %s23, %s24
      %p35 = scmp.eq.s32.totalorder %s15, 0
      %p36 = por %p34, %p35
      %p37 = scmp.ne.s32.totalorder %s23, %s24
      %p38 = scmp.eq.s32.totalorder %s16, 2
      %p39 = por %p37, %p38
      %p41 = scmp.ne.s32.totalorder %s24, %s40
      %p42 = scmp.eq.s32.totalorder %s16, 0
      %p43 = por %p41, %p42
      %s44 = ssub.s32 %s10, %s17
      %p45 = scmp.eq.s32.totalorder %s44, 0
      %s47 = sadd.s32 %s46, 1
      %s48 = scalar_select %p45, %s46, %s47
      %p51 = pneg %p45
      %p52 = scmp.eq.s32.totalorder %s10, 2
      %p53 = por %p51, %p52
      %p54 = scmp.ne.s32.totalorder %s46, %s49
      %p55 = scmp.eq.s32.totalorder %s10, 0
      %p56 = por %p54, %p55
      %p57 = scmp.ne.s32.totalorder %s46, %s49
      %p58 = scmp.eq.s32.totalorder %s15, 2
      %p59 = por %p57, %p58
      %p60 = scmp.ne.s32.totalorder %s49, %s50
      %p61 = scmp.eq.s32.totalorder %s15, 0
      %p62 = por %p60, %p61
      %p63 = scmp.ne.s32.totalorder %s49, %s50
      %p64 = scmp.eq.s32.totalorder %s16, 2
      %p65 = por %p63, %p64
      %p67 = scmp.ne.s32.totalorder %s50, %s66
      %p68 = scmp.eq.s32.totalorder %s16, 0
      %p69 = por %p67, %p68
      %p70 = scmp.le.s32.totalorder 1, %s10
      %p71 = scmp.lt.s32.totalorder %s10, 4
      %p72 = pnand %p70, %p71
      %p73 = pneg %p72
      // Predicated region
      $region9: #{tpu_custom_call.1} parent=5 // pred_check
        _
      $region10: #{tpu_custom_call.1} parent=5 // pred_check_branch
        %75 = sbr.rel (%p72) target = $region12
      $region11: #{tpu_custom_call.1} parent=5 // pred_region
        %s76 = ssub.s32 %s10, 1
      $region12: #{tpu_custom_call.1} parent=5 // pred_fallthru
        _
      %p77 = scmp.lt.s32.totalorder %s10, 3
      // Predicated region
      $region13: #{tpu_custom_call.1} parent=5 // pred_check
        %p78 = pneg %p77
      $region14: #{tpu_custom_call.1} parent=5 // pred_check_branch
        %80 = sbr.rel (%p78) target = $region16
      $region15: #{tpu_custom_call.1} parent=5 // pred_region
        // Predicated region
        $region17: #{tpu_custom_call.1} parent=15 // pred_check
          %p81 = pneg %p30
        $region18: #{tpu_custom_call.1} parent=15 // pred_check_branch
          %83 = sbr.rel (%p81) target = $region20
        $region19: #{tpu_custom_call.1} parent=15 // pred_region
          %s84 = smul.u32 16, %s10
          %s85 = ssub.s32 38, %s84
          %p86 = scmp.lt.s32.totalorder %s85, 16
          %s87 = scalar_select %p86, %s85, 16
          %s88 = smul.u32 128, %s87
          %p89 = scmp.lt.s32.totalorder %s84, 37
          %s90 = scalar_select %p89, %s84, 37
          %s91 = smul.addr %s90, 8
          %s92 = scalar_lea.vmem %s0, %s91
          %s93 = smul.u32 16, %s10
          %s94 = ssub.s32 38, %s93
          %p95 = scmp.lt.s32.totalorder %s94, 16
          %s96 = scalar_select %p95, %s94, 16
          %s97 = smul.u32 128, %s96
        $region20: #{tpu_custom_call.1} parent=15 // pred_fallthru
          _
      $region16: #{tpu_custom_call.1} parent=5 // pred_fallthru
        _
      %p98 = scmp.le.s32.totalorder 1, %s10
      %p99 = scmp.lt.s32.totalorder %s10, 4
      %p100 = pnand %p98, %p99
      %p101 = pneg %p100
      // Predicated region
      $region21: #{tpu_custom_call.1} parent=5 // pred_check
        _
      $region22: #{tpu_custom_call.1} parent=5 // pred_check_branch
        %103 = sbr.rel (%p100) target = $region24
      $region23: #{tpu_custom_call.1} parent=5 // pred_region
        %s104 = ssub.s32 %s10, 1
        %s105 = smul.u32 16, %s15
        %s106 = ssub.s32 38, %s105
        %p107 = scmp.lt.s32.totalorder %s106, 16
        %s108 = scalar_select %p107, %s106, 16
        %s109 = smul.u32 128, %s108
        %p110 = scmp.lt.s32.totalorder %s105, 37
        %s111 = scalar_select %p110, %s105, 37
        %s112 = smul.addr %s111, 8
        %s113 = scalar_lea.vmem %s0, %s112
        %p114 = pneg %p36
        %p115 = pneg %p33
        %p116 = pneg %p62
        %p117 = pneg %p59
        %s118 = sand.u32 %s49, 1
        %s119 = scalar_lea.sflag [#allocation3], %s118
        %s120 = sand.u32 %s49, 1
        %s121 = scalar_lea.vmem [#allocation2], %s120
        %s122 = smul.u32 16, %s15
        %s123 = ssub.s32 38, %s122
        %p124 = scmp.lt.s32.totalorder %s123, 16
        %s125 = scalar_select %p124, %s123, 16
        %s126 = smul.u32 128, %s125
        %p127 = scmp.lt.s32.totalorder %s122, 37
        %s128 = scalar_select %p127, %s122, 37
        %s129 = smul.addr %s128, 8
        %s130 = scalar_lea.vmem %s0, %s129
        %s131 = smul.u32 16, %s15
        %s132 = ssub.s32 38, %s131
        %p133 = scmp.lt.s32.totalorder %s132, 16
        %s134 = scalar_select %p133, %s132, 16
        %s135 = smul.u32 128, %s134
        %v136 = vld [vmem:[%s130] sm:$0xff]
        %v137 = vld [vmem:[%s130 + $0x8] sm:$0xff]
        %v138 = vld [vmem:[%s130 + $0x10] sm:$0xff]
        %v139 = vld [vmem:[%s130 + $0x18] sm:$0xff]
        %v140 = vld [vmem:[%s130 + $0x20] sm:$0xff]
        %v141 = vld [vmem:[%s130 + $0x28] sm:$0xff]
        %v142 = vld [vmem:[%s130 + $0x30] sm:$0xff]
        %v143 = vld [vmem:[%s130 + $0x38] sm:$0xff]
        %v144 = vld [vmem:[%s130 + $0x40] sm:$0xff]
        %v145 = vld [vmem:[%s130 + $0x48] sm:$0xff]
        %v146 = vld [vmem:[%s130 + $0x50] sm:$0xff]
        %v147 = vld [vmem:[%s130 + $0x58] sm:$0xff]
        %v148 = vld [vmem:[%s130 + $0x60] sm:$0xff]
        %v149 = vld [vmem:[%s130 + $0x68] sm:$0xff]
        %v150 = vld [vmem:[%s130 + $0x70] sm:$0xff]
        %v151 = vld [vmem:[%s130 + $0x78] sm:$0xff]
        %v152 = vmul.f32 %v136, %v136
        %v153 = vmul.f32 %v137, %v137
        %v154 = vmul.f32 %v138, %v138
        %v155 = vmul.f32 %v139, %v139
        %v156 = vmul.f32 %v140, %v140
        %v157 = vmul.f32 %v141, %v141
        %v158 = vmul.f32 %v142, %v142
        %v159 = vmul.f32 %v143, %v143
        %v160 = vmul.f32 %v144, %v144
        %v161 = vmul.f32 %v145, %v145
        %v162 = vmul.f32 %v146, %v146
        %v163 = vmul.f32 %v147, %v147
        %v164 = vmul.f32 %v148, %v148
        %v165 = vmul.f32 %v149, %v149
        %v166 = vmul.f32 %v150, %v150
        %v167 = vmul.f32 %v151, %v151
        %vm168 = vcmask 261120
        %v169 = vsel %vm168, %v152, 0.0
        %170 = vadd.xlane.f32.xlu0 %v169
        %v171 = vpop.xlane.xlu0 %170
        %v172 = vsel %vm168, %v153, 0.0
        %173 = vadd.xlane.f32.xlu0 %v172
        %v174 = vpop.xlane.xlu0 %173
        %v175 = vsel %vm168, %v154, 0.0
        %176 = vadd.xlane.f32.xlu0 %v175
        %v177 = vpop.xlane.xlu0 %176
        %v178 = vsel %vm168, %v155, 0.0
        %179 = vadd.xlane.f32.xlu0 %v178
        %v180 = vpop.xlane.xlu0 %179
        %v181 = vsel %vm168, %v156, 0.0
        %182 = vadd.xlane.f32.xlu0 %v181
        %v183 = vpop.xlane.xlu0 %182
        %v184 = vsel %vm168, %v157, 0.0
        %185 = vadd.xlane.f32.xlu0 %v184
        %v186 = vpop.xlane.xlu0 %185
        %v187 = vsel %vm168, %v158, 0.0
        %188 = vadd.xlane.f32.xlu0 %v187
        %v189 = vpop.xlane.xlu0 %188
        %v190 = vsel %vm168, %v159, 0.0
        %191 = vadd.xlane.f32.xlu0 %v190
        %v192 = vpop.xlane.xlu0 %191
        %v193 = vsel %vm168, %v160, 0.0
        %194 = vadd.xlane.f32.xlu0 %v193
        %v195 = vpop.xlane.xlu0 %194
        %v196 = vsel %vm168, %v161, 0.0
        %197 = vadd.xlane.f32.xlu0 %v196
        %v198 = vpop.xlane.xlu0 %197
        %v199 = vsel %vm168, %v162, 0.0
        %200 = vadd.xlane.f32.xlu0 %v199
        %v201 = vpop.xlane.xlu0 %200
        %v202 = vsel %vm168, %v163, 0.0
        %203 = vadd.xlane.f32.xlu0 %v202
        %v204 = vpop.xlane.xlu0 %203
        %v205 = vsel %vm168, %v164, 0.0
        %206 = vadd.xlane.f32.xlu0 %v205
        %v207 = vpop.xlane.xlu0 %206
        %v208 = vsel %vm168, %v165, 0.0
        %209 = vadd.xlane.f32.xlu0 %v208
        %v210 = vpop.xlane.xlu0 %209
        %v211 = vsel %vm168, %v166, 0.0
        %212 = vadd.xlane.f32.xlu0 %v211
        %v213 = vpop.xlane.xlu0 %212
        %v214 = vsel %vm168, %v167, 0.0
        %215 = vadd.xlane.f32.xlu0 %v214
        %v216 = vpop.xlane.xlu0 %215
        %v217 = vmul.f32 %v171, -0.5
        %v218 = vmul.f32 %v174, -0.5
        %v219 = vmul.f32 %v177, -0.5
        %v220 = vmul.f32 %v180, -0.5
        %v221 = vmul.f32 %v183, -0.5
        %v222 = vmul.f32 %v186, -0.5
        %v223 = vmul.f32 %v189, -0.5
        %v224 = vmul.f32 %v192, -0.5
        %v225 = vmul.f32 %v195, -0.5
        %v226 = vmul.f32 %v198, -0.5
        %v227 = vmul.f32 %v201, -0.5
        %v228 = vmul.f32 %v204, -0.5
        %v229 = vmul.f32 %v207, -0.5
        %v230 = vmul.f32 %v210, -0.5
        %v231 = vmul.f32 %v213, -0.5
        %v232 = vmul.f32 %v216, -0.5
        %v233 = vsub.f32 %v217, 29.406033
        %v234 = vsub.f32 %v218, 29.406033
        %v235 = vsub.f32 %v219, 29.406033
        %v236 = vsub.f32 %v220, 29.406033
        %v237 = vsub.f32 %v221, 29.406033
        %v238 = vsub.f32 %v222, 29.406033
        %v239 = vsub.f32 %v223, 29.406033
        %v240 = vsub.f32 %v224, 29.406033
        %v241 = vsub.f32 %v225, 29.406033
        %v242 = vsub.f32 %v226, 29.406033
        %v243 = vsub.f32 %v227, 29.406033
        %v244 = vsub.f32 %v228, 29.406033
        %v245 = vsub.f32 %v229, 29.406033
        %v246 = vsub.f32 %v230, 29.406033
        %v247 = vsub.f32 %v231, 29.406033
        %v248 = vsub.f32 %v232, 29.406033
        %v265 = vlaneseq
        %v266 = vand.u32 %v265, 127
        %v267 = vlaneseq
        %v268 = vshrl.u32 %v267, 7
        %v269 = vsub.s32 %v266, %v268
        %v270 = vrot.slane %v233, %v269
        %v271 = vadd.s32 %v266, 4294967288
        %v272 = vlaneseq
        %v273 = vshrl.u32 %v272, 7
        %v274 = vsub.s32 %v271, %v273
        %v275 = vrot.slane %v234, %v274
        %vm276 = vcmask 130112
        %v277 = vsel %vm276, %v275, %v270
        %v278 = vadd.s32 %v266, 4294967280
        %v279 = vlaneseq
        %v280 = vshrl.u32 %v279, 7
        %v281 = vsub.s32 %v278, %v280
        %v282 = vrot.slane %v235, %v281
        %vm283 = vcmask 195712
        %v284 = vsel %vm283, %v282, %v277
        %v285 = vadd.s32 %v266, 4294967272
        %v286 = vlaneseq
        %v287 = vshrl.u32 %v286, 7
        %v288 = vsub.s32 %v285, %v287
        %v289 = vrot.slane %v236, %v288
        %vm290 = vcmask 261312
        %v291 = vsel %vm290, %v289, %v284
        %v292 = vadd.s32 %v266, 4294967264
        %v293 = vlaneseq
        %v294 = vshrl.u32 %v293, 7
        %v295 = vsub.s32 %v292, %v294
        %v296 = vrot.slane %v237, %v295
        %vm297 = vcmask 326912
        %v298 = vsel %vm297, %v296, %v291
        %v299 = vadd.s32 %v266, 4294967256
        %v300 = vlaneseq
        %v301 = vshrl.u32 %v300, 7
        %v302 = vsub.s32 %v299, %v301
        %v303 = vrot.slane %v238, %v302
        %vm304 = vcmask 392512
        %v305 = vsel %vm304, %v303, %v298
        %v306 = vadd.s32 %v266, 4294967248
        %v307 = vlaneseq
        %v308 = vshrl.u32 %v307, 7
        %v309 = vsub.s32 %v306, %v308
        %v310 = vrot.slane %v239, %v309
        %vm311 = vcmask 458112
        %v312 = vsel %vm311, %v310, %v305
        %v313 = vadd.s32 %v266, 4294967240
        %v314 = vlaneseq
        %v315 = vshrl.u32 %v314, 7
        %v316 = vsub.s32 %v313, %v315
        %v317 = vrot.slane %v240, %v316
        %vm318 = vcmask 523712
        %v319 = vsel %vm318, %v317, %v312
        %v320 = vadd.s32 %v266, 4294967232
        %v321 = vlaneseq
        %v322 = vshrl.u32 %v321, 7
        %v323 = vsub.s32 %v320, %v322
        %v324 = vrot.slane %v241, %v323
        %vm325 = vcmask 589312
        %v326 = vsel %vm325, %v324, %v319
        %v327 = vadd.s32 %v266, 4294967224
        %v328 = vlaneseq
        %v329 = vshrl.u32 %v328, 7
        %v330 = vsub.s32 %v327, %v329
        %v331 = vrot.slane %v242, %v330
        %vm332 = vcmask 654912
        %v333 = vsel %vm332, %v331, %v326
        %v334 = vadd.s32 %v266, 4294967216
        %v335 = vlaneseq
        %v336 = vshrl.u32 %v335, 7
        %v337 = vsub.s32 %v334, %v336
        %v338 = vrot.slane %v243, %v337
        %vm339 = vcmask 720512
        %v340 = vsel %vm339, %v338, %v333
        %v341 = vadd.s32 %v266, 4294967208
        %v342 = vlaneseq
        %v343 = vshrl.u32 %v342, 7
        %v344 = vsub.s32 %v341, %v343
        %v345 = vrot.slane %v244, %v344
        %vm346 = vcmask 786112
        %v347 = vsel %vm346, %v345, %v340
        %v348 = vadd.s32 %v266, 4294967200
        %v349 = vlaneseq
        %v350 = vshrl.u32 %v349, 7
        %v351 = vsub.s32 %v348, %v350
        %v352 = vrot.slane %v245, %v351
        %vm353 = vcmask 851712
        %v354 = vsel %vm353, %v352, %v347
        %v355 = vadd.s32 %v266, 4294967192
        %v356 = vlaneseq
        %v357 = vshrl.u32 %v356, 7
        %v358 = vsub.s32 %v355, %v357
        %v359 = vrot.slane %v246, %v358
        %vm360 = vcmask 917312
        %v361 = vsel %vm360, %v359, %v354
        %v362 = vadd.s32 %v266, 4294967184
        %v363 = vlaneseq
        %v364 = vshrl.u32 %v363, 7
        %v365 = vsub.s32 %v362, %v364
        %v366 = vrot.slane %v247, %v365
        %vm367 = vcmask 982912
        %v368 = vsel %vm367, %v366, %v361
        %v369 = vadd.s32 %v266, 4294967176
        %v370 = vlaneseq
        %v371 = vshrl.u32 %v370, 7
        %v372 = vsub.s32 %v369, %v371
        %v373 = vrot.slane %v248, %v372
        %vm374 = vcmask 1048512
        %v375 = vsel %vm374, %v373, %v368
        %377 = vst [vmem:[%s121] sm:$0x1] %v375
        %s378 = sand.u32 %s49, 1
        %s379 = scalar_lea.sflag [#allocation3], %s378
        %s380 = sand.u32 %s49, 1
        %s381 = scalar_lea.vmem [#allocation2], %s380
        // Predicated region
        $region25: #{tpu_custom_call.1} parent=23 // pred_check
          %p382 = pneg %p59
        $region26: #{tpu_custom_call.1} parent=23 // pred_check_branch
          %384 = sbr.rel (%p382) target = $region28
        $region27: #{tpu_custom_call.1} parent=23 // pred_region
          %s386 = ssub.s32 16, 16
          %387 = vsyncadd %s379, %s386
          %s388 = smul.addr %s15, 16
          %s389 = scalar_lea.hbm %s1, %s388
          %s391 = sshll.u32 %s381, 4
          %s392 = int_to_ptr.vmem [resolvable:$true] %s391
          %394 = dma.vmem_to_hbm [thread:$0]  %s392, 16, %s389, %s379
        $region28: #{tpu_custom_call.1} parent=23 // pred_fallthru
          _
      $region24: #{tpu_custom_call.1} parent=5 // pred_fallthru
        _
      %p395 = scmp.le.s32.totalorder 2, %s10
      // Predicated region
      $region29: #{tpu_custom_call.1} parent=5 // pred_check
        %p396 = pneg %p395
      $region30: #{tpu_custom_call.1} parent=5 // pred_check_branch
        %398 = sbr.rel (%p396) target = $region32
      $region31: #{tpu_custom_call.1} parent=5 // pred_region
        %s399 = ssub.s32 %s10, 2
        // Predicated region
        $region33: #{tpu_custom_call.1} parent=31 // pred_check
          %p400 = pneg %p65
        $region34: #{tpu_custom_call.1} parent=31 // pred_check_branch
          %402 = sbr.rel (%p400) target = $region36
        $region35: #{tpu_custom_call.1} parent=31 // pred_region
          %s403 = sand.u32 %s50, 1
          %s404 = scalar_lea.sflag [#allocation3], %s403
          %s405 = sand.u32 %s50, 1
          %s406 = scalar_lea.vmem [#allocation2], %s405
          %407 = dma.done %s404, 16
        $region36: #{tpu_custom_call.1} parent=31 // pred_fallthru
          _
      $region32: #{tpu_custom_call.1} parent=5 // pred_fallthru
        _
    $region6: #{tpu_custom_call.1} parent=1 // loop_footer
      %s14 = sadd.s32 1, %s10
    $region7: #{tpu_custom_call.1} parent=1 // loop_footer_branch
      %9 = sbr.rel target = $region3
    $region8: #{tpu_custom_call.1} parent=1 // loop_exit
      _
    %408 = vsyncpa [#allocation3], 1
    %s409 = scalar_lea.sflag [#allocation3], 1
    %410 = vsyncpa %s409, 1

</llo_original>
